<compile_context>
chip_gen: v5e
topology: v5e:2x2
jax: 0.10.0
libtpu: 0.0.40
codegen_flags: <defaults>
</compile_context>

<pallas_src>
import jax
import jax.numpy as jnp
from jax.experimental import pallas as pl
from jax.experimental.pallas import tpu as pltpu

# module constants (globals in the original PyTorch file)
ATTENTION_HEADS = 4      # H
N = 16                   # number of mesh-grid positions
K = 8                    # number of RPE buckets
NUM_KP = 5               # the hard-coded "5" keypoints in the module
COORD = 2                # (x, y) -> 5 * 2 = 10 features
FEAT = NUM_KP * COORD    # 10
FEAT_AUG = FEAT + 1      # +1 bias row carrying the mesh-grid contribution
J = 16                   # second dim of the distance matrix (gather width)
B = 2                    # batch size for the demo


def kr_rpe_kernel(kp_aug_ref, wg_aug_ref, out_ref):
    # kp_aug_ref (B, 11)        f32  flattened keypoints + constant-1 bias column
    # wg_aug_ref (11, H*N*J)    f32  folded weights; last row is the mesh-grid part
    # out_ref    (B, H*N*J)     f32  lane-dense output; wrapper reshapes to (B,H,N,J)
    out_ref[...] = jnp.dot(kp_aug_ref[...], wg_aug_ref[...],
                           preferred_element_type=jnp.float32)


def _fold_weights(W, mesh_grid, distance_matrix):
    """One-time (init-time) folding of raw-reshape + gather + mesh part into W.

    Returns wg_aug of shape (11, H*N*J) in float32. distance_matrix values are
    assumed to lie in [0, K); out-of-range values would be silently clamped by
    the host-side gather.
    """
    W32 = W.astype(jnp.float32)
    n_mesh = mesh_grid.shape[0]
    Jd = distance_matrix.shape[1]
    H, Kb = ATTENTION_HEADS, K
    hnj = H * n_mesh * Jd

    # mesh_flat[n, 2p+c] = mesh_grid[n, c]  (coords tiled over the 5 keypoints)
    mesh_flat = jnp.tile(mesh_grid.astype(jnp.float32), (1, NUM_KP))      # (N, 10)
    p = jnp.arange(H * n_mesh)
    # Raw reshape (B,N,H*K)->(B,H,N,K) followed by gather(DM) is equivalent to:
    #   out[b, h*N+n, j] = A[b, (h*N+n)//H, ((h*N+n)%H)*K + DM[n, j]]
    mesh_rep = mesh_flat[p // H, :]                                       # (H*N, 10)
    cc = ((p % H)[:, None].astype(jnp.int32) * Kb
          + distance_matrix[p % n_mesh, :].astype(jnp.int32))             # (H*N, J)
    wg = W32[:, cc]                                                       # (10, H*N, J)
    mesh_part = jnp.einsum('rf,frj->rj', mesh_rep, wg)                    # (H*N, J)
    wg_flat = wg.reshape(FEAT, hnj)                                       # (10, H*N*J)
    mesh_part_flat = mesh_part.reshape(1, hnj)                            # (1,  H*N*J)
    # out = mesh_part - kp @ wg  ==  [kp, 1] @ concat([-wg, mesh_part])
    wg_aug = jnp.concatenate([-wg_flat, mesh_part_flat], axis=0)          # (11, H*N*J)
    return wg_aug


def make_kr_rpe(mesh_grid, distance_matrix, W):
    """Build the forward fn; all batch-independent folding happens here, once."""
    H = ATTENTION_HEADS
    n_mesh = mesh_grid.shape[0]
    Jd = distance_matrix.shape[1]
    hnj = H * n_mesh * Jd                                                 # 4*16*16 = 1024
    wg_aug = jax.block_until_ready(_fold_weights(W, mesh_grid, distance_matrix))

    def forward(keypoints):
        Bsz = keypoints.shape[0]
        kp_flat = keypoints.reshape(Bsz, FEAT).astype(jnp.float32)        # (B, 10)
        kp_aug = jnp.concatenate(
            [kp_flat, jnp.ones((Bsz, 1), jnp.float32)], axis=1)           # (B, 11)

        out_flat = pl.pallas_call(
            kr_rpe_kernel,
            out_shape=jax.ShapeDtypeStruct((Bsz, hnj), jnp.float32),
            # Gridless: whole problem (<60 KB) lives in VMEM in one shot; no
            # per-step pipeline prologue/epilogue, no double-buffering.
            in_specs=[
                pl.BlockSpec(memory_space=pltpu.MemorySpace.VMEM),
                pl.BlockSpec(memory_space=pltpu.MemorySpace.VMEM),
            ],
            out_specs=pl.BlockSpec(memory_space=pltpu.MemorySpace.VMEM),
            cost_estimate=pl.CostEstimate(
                flops=2 * Bsz * FEAT_AUG * hnj,
                bytes_accessed=(Bsz * FEAT_AUG + FEAT_AUG * hnj + Bsz * hnj) * 4,
                transcendentals=0,
            ),
        )(kp_aug, wg_aug)

        # free leading-dim split: (B, H*N*J) -> (B, H, N, J)
        return out_flat.reshape(Bsz, H, n_mesh, Jd)

    return jax.jit(forward)


def _reference(keypoints, mesh_grid, distance_matrix, W):
    """Pure-JAX mirror of the PyTorch forward (for validation)."""
    Bsz = keypoints.shape[0]
    mg = jnp.broadcast_to(mesh_grid[:, None, :], (N, NUM_KP, COORD))
    mg = jnp.broadcast_to(mg[None], (Bsz, N, NUM_KP, COORD))
    ck = jnp.broadcast_to(keypoints[:, None, :, :], (Bsz, N, NUM_KP, COORD))
    Dt = (mg - ck).reshape(Bsz, N, FEAT)
    At = Dt @ W.astype(jnp.float32)
    At = At.reshape(Bsz, ATTENTION_HEADS, N, K)
    idx = jnp.broadcast_to(distance_matrix[None, None],
                           (Bsz, ATTENTION_HEADS, N, distance_matrix.shape[1]))
    return jnp.take_along_axis(At, idx, axis=3)


if __name__ == "__main__":
    key = jax.random.PRNGKey(0)
    k1, k2, k3, k4 = jax.random.split(key, 4)

    mesh_grid = jax.random.normal(k1, (N, COORD), dtype=jnp.float32)
    distance_matrix = jax.random.randint(k2, (N, J), 0, K, dtype=jnp.int32)
    W = jax.random.normal(k3, (FEAT, ATTENTION_HEADS * K), dtype=jnp.float32)
    keypoints = jax.random.normal(k4, (B, NUM_KP, COORD), dtype=jnp.float32)

    # Build once (all weight folding happens here), call per-batch afterwards.
    kr_rpe = make_kr_rpe(mesh_grid, distance_matrix, W)

    out = kr_rpe(keypoints)
    out = jax.block_until_ready(out)

    ref = _reference(keypoints, mesh_grid, distance_matrix, W)
    assert out.shape == (B, ATTENTION_HEADS, N, J), out.shape
    assert jnp.allclose(out, ref, atol=1e-4, rtol=1e-4), "mismatch vs reference"
    print("KERNEL_OK")
</pallas_src>

<mosaic_0001>
module attributes {stable_mosaic.version = 11 : i64} {
  func.func @kr_rpe_kernel(%arg0: memref<2x11xf32, #tpu.memory_space<vmem>>, %arg1: memref<11x1024xf32, #tpu.memory_space<vmem>>, %arg2: memref<2x1024xf32, #tpu.memory_space<vmem>>) attributes {dimension_semantics = [], scalar_prefetch = 0 : i64, scratch_operands = 0 : i64, tpu.core_type = #tpu.core_type<tc>} {
    %c0 = arith.constant 0 : index
    %c0_0 = arith.constant 0 : index
    %0 = vector.load %arg0[%c0, %c0_0] : memref<2x11xf32, #tpu.memory_space<vmem>>, vector<2x11xf32>
    %c0_1 = arith.constant 0 : index
    %c0_2 = arith.constant 0 : index
    %1 = vector.load %arg1[%c0_1, %c0_2] : memref<11x1024xf32, #tpu.memory_space<vmem>>, vector<11x1024xf32>
    %cst = arith.constant dense<0.000000e+00> : vector<2x1024xf32>
    %2 = tpu.matmul %0, %1, %cst {dimension_numbers = #tpu.dot_dimension_numbers<[1], [0], [0], [1], [0, 0, 1, 1], [], []>} : vector<2x11xf32>, vector<11x1024xf32>, vector<2x1024xf32> -> vector<2x1024xf32>
    %c0_3 = arith.constant 0 : index
    %c0_4 = arith.constant 0 : index
    %3 = vector.load %arg2[%c0_3, %c0_4] : memref<2x1024xf32, #tpu.memory_space<vmem>>, vector<2x1024xf32>
    tpu.vector_store %arg2[%c0_3, %c0_4], %2 {strides = array<i32>} : memref<2x1024xf32, #tpu.memory_space<vmem>>, vector<2x1024xf32>,
    return
  }
}

</mosaic_0001>

<llo_original>
// kernel: forward.1
$region0: #{forward.1}
  #allocation0 [shape = 'u32[]', space=smem, size = 0x4, offset = 0x4, fixed_abs, tag = 'smem constant byte address 0x4 - core index']
  #allocation1 [shape = 'u32[72,128]{1,0:T(1,128)}', space=vmem, size = 0x9000, scoped, tag = 'internal scratch']
  %s0 = inlined_call_operand.vmem [shape: f32[2,11], index: 0, kind: input, shape index: {}]
  %s1 = inlined_call_operand.hbm [shape: f32[11,1024], index: 1, kind: input, shape index: {}]
  %s2 = inlined_call_operand.vmem [shape: f32[2,1024], index: 2, kind: output, shape index: {}]
  %s3 = sld [smem:[#allocation0]]
  $region22: #{forward.1} parent=0
    _
  %s5 = ssub.s32 1, %s3
  %s6 = scalar_select 0, %s5, %s3
  $region1: #{forward.1} parent=0
    #allocation2 [shape = 'u8[65536]{0}', space=vmem, size = 0x10000, scoped, tag = 'input window, operand 1, single buffered']
    #allocation3 [shape = 's32[1]{0}', space=sflag, size = 0x4, scoped, tag = 'scoped memory for forward.1']
    %7 = vsyncpa [#allocation3], 0
    // Predicated region
    $region2: #{forward.1} parent=1 // pred_check
      _
    $region3: #{forward.1} parent=1 // pred_check_branch
      %9 = sbr.rel (0) target = $region5
    $region4: #{forward.1} parent=1 // pred_region
      _
    $region5: #{forward.1} parent=1 // pred_fallthru
      _
    // Predicated region
    $region6: #{forward.1} parent=1 // pred_check
      _
    $region7: #{forward.1} parent=1 // pred_check_branch
      %11 = sbr.rel (0) target = $region9
    $region8: #{forward.1} parent=1 // pred_region
      %13 = vsyncadd [#allocation3], 0
      %s14 = sshll.u32 %s1, 4
      %s15 = int_to_ptr.hbm [resolvable:$true] %s14
      %s16 = sshll.u32 [#allocation2], 4
      %s17 = int_to_ptr.vmem [resolvable:$true] %s16
      %22 = dma.hbm_to_vmem [thread:$0]  %s15, 2048, %s17, [#allocation3], 1024, 1024, 64
    $region9: #{forward.1} parent=1 // pred_fallthru
      _
    // Predicated region
    $region10: #{forward.1} parent=1 // pred_check
      _
    $region11: #{forward.1} parent=1 // pred_check_branch
      %24 = sbr.rel (0) target = $region13
    $region12: #{forward.1} parent=1 // pred_region
      %26 = dma.done [#allocation3], 2048
    $region13: #{forward.1} parent=1 // pred_fallthru
      _
    %v27 = vld [vmem:[%s0] sm:$0x3]
    %v28 = vld [vmem:[#allocation2] sm:$0xff]
    %v29 = vld [vmem:[#allocation2 + $0x8] sm:$0xff]
    %v30 = vld [vmem:[#allocation2 + $0x10] sm:$0xff]
    %v31 = vld [vmem:[#allocation2 + $0x18] sm:$0xff]
    %v32 = vld [vmem:[#allocation2 + $0x20] sm:$0xff]
    %v33 = vld [vmem:[#allocation2 + $0x28] sm:$0xff]
    %v34 = vld [vmem:[#allocation2 + $0x30] sm:$0xff]
    %v35 = vld [vmem:[#allocation2 + $0x38] sm:$0xff]
    %v36 = vld [vmem:[#allocation2 + $0x40] sm:$0x7]
    %v37 = vld [vmem:[#allocation2 + $0x48] sm:$0x7]
    %v38 = vld [vmem:[#allocation2 + $0x50] sm:$0x7]
    %v39 = vld [vmem:[#allocation2 + $0x58] sm:$0x7]
    %v40 = vld [vmem:[#allocation2 + $0x60] sm:$0x7]
    %v41 = vld [vmem:[#allocation2 + $0x68] sm:$0x7]
    %v42 = vld [vmem:[#allocation2 + $0x70] sm:$0x7]
    %v43 = vld [vmem:[#allocation2 + $0x78] sm:$0x7]
    %vm44 = vcmask 89088
    %v46 = vsel %vm44, %v27, 0
    %vm48 = vcmask 1042432
    %v50 = vsel %vm48, %v36, 0
    %v53 = vsel %vm48, %v37, 0
    %v56 = vsel %vm48, %v38, 0
    %v59 = vsel %vm48, %v39, 0
    %v62 = vsel %vm48, %v40, 0
    %v65 = vsel %vm48, %v41, 0
    %v68 = vsel %vm48, %v42, 0
    %v71 = vsel %vm48, %v43, 0
    %73 = vmatpush.msra.mxu0 0.0
    %74 = vmatpush.msra.mxu0 0.0
    %75 = vmatpush.msra.mxu0 0.0
    %76 = vmatpush.msra.mxu0 0.0
    %77 = vmatpush.msra.mxu0 0.0
    %78 = vmatpush.msra.mxu0 0.0
    %79 = vmatpush.msra.mxu0 0.0
    %80 = vmatpush.msra.mxu0 0.0
    %81 = vmatpush.msra.mxu0 0.0
    %82 = vmatpush.msra.mxu0 0.0
    %83 = vmatpush.msra.mxu0 0.0
    %84 = vmatpush.msra.mxu0 0.0
    %85 = vmatpush.msra.mxu0 0.0
    %86 = vmatpush.msra.mxu0 0.0
    %87 = vmatpush.msra.mxu0 %v50
    %88 = vmatpush.msra.mxu0 %v28
    %89 = vmatmul.f32.gmra.mxu0 %v46
    %v90 = vpop.f32.mrf.mxu0
    %v91 = vadd.f32 0.0, %v90
    %92 = vdwg.mxu0
    %93 = vmatpush.msra.mxu0 0.0
    %94 = vmatpush.msra.mxu0 0.0
    %95 = vmatpush.msra.mxu0 0.0
    %96 = vmatpush.msra.mxu0 0.0
    %97 = vmatpush.msra.mxu0 0.0
    %98 = vmatpush.msra.mxu0 0.0
    %99 = vmatpush.msra.mxu0 0.0
    %100 = vmatpush.msra.mxu0 0.0
    %101 = vmatpush.msra.mxu0 0.0
    %102 = vmatpush.msra.mxu0 0.0
    %103 = vmatpush.msra.mxu0 0.0
    %104 = vmatpush.msra.mxu0 0.0
    %105 = vmatpush.msra.mxu0 0.0
    %106 = vmatpush.msra.mxu0 0.0
    %107 = vmatpush.msra.mxu0 %v53
    %108 = vmatpush.msra.mxu0 %v29
    %109 = vmatmul.f32.gmra.mxu0 %v46
    %v110 = vpop.f32.mrf.mxu0
    %v111 = vadd.f32 0.0, %v110
    %112 = vdwg.mxu0
    %113 = vmatpush.msra.mxu0 0.0
    %114 = vmatpush.msra.mxu0 0.0
    %115 = vmatpush.msra.mxu0 0.0
    %116 = vmatpush.msra.mxu0 0.0
    %117 = vmatpush.msra.mxu0 0.0
    %118 = vmatpush.msra.mxu0 0.0
    %119 = vmatpush.msra.mxu0 0.0
    %120 = vmatpush.msra.mxu0 0.0
    %121 = vmatpush.msra.mxu0 0.0
    %122 = vmatpush.msra.mxu0 0.0
    %123 = vmatpush.msra.mxu0 0.0
    %124 = vmatpush.msra.mxu0 0.0
    %125 = vmatpush.msra.mxu0 0.0
    %126 = vmatpush.msra.mxu0 0.0
    %127 = vmatpush.msra.mxu0 %v56
    %128 = vmatpush.msra.mxu0 %v30
    %129 = vmatmul.f32.gmra.mxu0 %v46
    %v130 = vpop.f32.mrf.mxu0
    %v131 = vadd.f32 0.0, %v130
    %132 = vdwg.mxu0
    %133 = vmatpush.msra.mxu0 0.0
    %134 = vmatpush.msra.mxu0 0.0
    %135 = vmatpush.msra.mxu0 0.0
    %136 = vmatpush.msra.mxu0 0.0
    %137 = vmatpush.msra.mxu0 0.0
    %138 = vmatpush.msra.mxu0 0.0
    %139 = vmatpush.msra.mxu0 0.0
    %140 = vmatpush.msra.mxu0 0.0
    %141 = vmatpush.msra.mxu0 0.0
    %142 = vmatpush.msra.mxu0 0.0
    %143 = vmatpush.msra.mxu0 0.0
    %144 = vmatpush.msra.mxu0 0.0
    %145 = vmatpush.msra.mxu0 0.0
    %146 = vmatpush.msra.mxu0 0.0
    %147 = vmatpush.msra.mxu0 %v59
    %148 = vmatpush.msra.mxu0 %v31
    %149 = vmatmul.f32.gmra.mxu0 %v46
    %v150 = vpop.f32.mrf.mxu0
    %v151 = vadd.f32 0.0, %v150
    %152 = vdwg.mxu0
    %153 = vmatpush.msra.mxu0 0.0
    %154 = vmatpush.msra.mxu0 0.0
    %155 = vmatpush.msra.mxu0 0.0
    %156 = vmatpush.msra.mxu0 0.0
    %157 = vmatpush.msra.mxu0 0.0
    %158 = vmatpush.msra.mxu0 0.0
    %159 = vmatpush.msra.mxu0 0.0
    %160 = vmatpush.msra.mxu0 0.0
    %161 = vmatpush.msra.mxu0 0.0
    %162 = vmatpush.msra.mxu0 0.0
    %163 = vmatpush.msra.mxu0 0.0
    %164 = vmatpush.msra.mxu0 0.0
    %165 = vmatpush.msra.mxu0 0.0
    %166 = vmatpush.msra.mxu0 0.0
    %167 = vmatpush.msra.mxu0 %v62
    %168 = vmatpush.msra.mxu0 %v32
    %169 = vmatmul.f32.gmra.mxu0 %v46
    %v170 = vpop.f32.mrf.mxu0
    %v171 = vadd.f32 0.0, %v170
    %172 = vdwg.mxu0
    %173 = vmatpush.msra.mxu0 0.0
    %174 = vmatpush.msra.mxu0 0.0
    %175 = vmatpush.msra.mxu0 0.0
    %176 = vmatpush.msra.mxu0 0.0
    %177 = vmatpush.msra.mxu0 0.0
    %178 = vmatpush.msra.mxu0 0.0
    %179 = vmatpush.msra.mxu0 0.0
    %180 = vmatpush.msra.mxu0 0.0
    %181 = vmatpush.msra.mxu0 0.0
    %182 = vmatpush.msra.mxu0 0.0
    %183 = vmatpush.msra.mxu0 0.0
    %184 = vmatpush.msra.mxu0 0.0
    %185 = vmatpush.msra.mxu0 0.0
    %186 = vmatpush.msra.mxu0 0.0
    %187 = vmatpush.msra.mxu0 %v65
    %188 = vmatpush.msra.mxu0 %v33
    %189 = vmatmul.f32.gmra.mxu0 %v46
    %v190 = vpop.f32.mrf.mxu0
    %v191 = vadd.f32 0.0, %v190
    %192 = vdwg.mxu0
    %193 = vmatpush.msra.mxu0 0.0
    %194 = vmatpush.msra.mxu0 0.0
    %195 = vmatpush.msra.mxu0 0.0
    %196 = vmatpush.msra.mxu0 0.0
    %197 = vmatpush.msra.mxu0 0.0
    %198 = vmatpush.msra.mxu0 0.0
    %199 = vmatpush.msra.mxu0 0.0
    %200 = vmatpush.msra.mxu0 0.0
    %201 = vmatpush.msra.mxu0 0.0
    %202 = vmatpush.msra.mxu0 0.0
    %203 = vmatpush.msra.mxu0 0.0
    %204 = vmatpush.msra.mxu0 0.0
    %205 = vmatpush.msra.mxu0 0.0
    %206 = vmatpush.msra.mxu0 0.0
    %207 = vmatpush.msra.mxu0 %v68
    %208 = vmatpush.msra.mxu0 %v34
    %209 = vmatmul.f32.gmra.mxu0 %v46
    %v210 = vpop.f32.mrf.mxu0
    %v211 = vadd.f32 0.0, %v210
    %212 = vdwg.mxu0
    %213 = vmatpush.msra.mxu0 0.0
    %214 = vmatpush.msra.mxu0 0.0
    %215 = vmatpush.msra.mxu0 0.0
    %216 = vmatpush.msra.mxu0 0.0
    %217 = vmatpush.msra.mxu0 0.0
    %218 = vmatpush.msra.mxu0 0.0
    %219 = vmatpush.msra.mxu0 0.0
    %220 = vmatpush.msra.mxu0 0.0
    %221 = vmatpush.msra.mxu0 0.0
    %222 = vmatpush.msra.mxu0 0.0
    %223 = vmatpush.msra.mxu0 0.0
    %224 = vmatpush.msra.mxu0 0.0
    %225 = vmatpush.msra.mxu0 0.0
    %226 = vmatpush.msra.mxu0 0.0
    %227 = vmatpush.msra.mxu0 %v71
    %228 = vmatpush.msra.mxu0 %v35
    %229 = vmatmul.f32.gmra.mxu0 %v46
    %v230 = vpop.f32.mrf.mxu0
    %v231 = vadd.f32 0.0, %v230
    %232 = vdwg.mxu0
    %v241 = vrot.slane %v111, 6
    %v242 = vrot.slane %v131, 4
    %v243 = vrot.slane %v151, 2
    %v244 = vrot.slane %v191, 6
    %v245 = vrot.slane %v211, 4
    %v246 = vrot.slane %v231, 2
    %vm247 = vcmask 1041408
    %v248 = vsel %vm247, %v91, %v241
    %vm249 = vcmask 1045508
    %v250 = vsel %vm249, %v242, %v243
    %vm251 = vcmask 1043456
    %v252 = vsel %vm251, %v248, %v250
    %v253 = vsel %vm247, %v171, %v244
    %v254 = vsel %vm249, %v245, %v246
    %v255 = vsel %vm251, %v253, %v254
    %258 = vst [vmem:[%s2] sm:$0xff] %v252
    %259 = vst [vmem:[%s2 + $0x8] sm:$0xff] %v255
    // Predicated region
    $region14: #{forward.1} parent=1 // pred_check
      _
    $region15: #{forward.1} parent=1 // pred_check_branch
      %261 = sbr.rel (0) target = $region17
    $region16: #{forward.1} parent=1 // pred_region
      _
    $region17: #{forward.1} parent=1 // pred_fallthru
      _
    // Predicated region
    $region18: #{forward.1} parent=1 // pred_check
      _
    $region19: #{forward.1} parent=1 // pred_check_branch
      %263 = sbr.rel (0) target = $region21
    $region20: #{forward.1} parent=1 // pred_region
      _
    $region21: #{forward.1} parent=1 // pred_fallthru
      _
    %264 = vsyncpa [#allocation3], 1

</llo_original>
